<compile_context>
chip_gen: v7x
topology: tpu7x:2x2x1
jax: 0.10.0
libtpu: 0.0.40
codegen_flags: <defaults>
</compile_context>

<pallas_src>
import jax
import jax.numpy as jnp
import numpy as np
from jax.experimental import pallas as pl
from jax.experimental.pallas import tpu as pltpu

LN_EPS = 1e-5  # PyTorch nn.LayerNorm default


# ---------------------------------------------------------------------------
# Fused kernel: gc1 -> norm1 -> (dropout) -> conv -> gc2 -> norm2 -> log_softmax
# Data layout inside the kernel: (Tb, V*C) — rows = time steps, lanes = (vertex, channel).
# ---------------------------------------------------------------------------
def _fused_gcn_kernel(x_ref, m1_ref, mc_ref, m2_ref, p_ref, q_ref,
                      g1_ref, b1_ref, g2_ref, b2_ref, o_ref):
    f32 = jnp.float32
    x = x_ref[0].astype(f32)            # (Tb, V*Cin)
    m1 = m1_ref[...].astype(f32)        # (V*Cin, V*Cout)  fused conv+adjacency of gc1
    mc = mc_ref[...].astype(f32)        # (V*Cout, V*Cout) block-diagonal 1x1 conv
    m2 = m2_ref[...].astype(f32)        # (V*Cout, V*Cout) fused conv+adjacency of gc2
    P = p_ref[...].astype(f32)          # per-vertex channel-group mean projector
    Q = q_ref[...].astype(f32)          # per-channel vertex-sum (broadcast back) operator

    def dot(a, b):
        return jnp.dot(a, b, preferred_element_type=f32)

    def group_layernorm(y, gamma, beta):
        # LayerNorm over each vertex's C channels (groups of C adjacent lanes).
        mu = dot(y, P)                              # group mean, broadcast over the group
        d = y - mu
        var = dot(d * d, P)                         # biased group variance (PyTorch LN)
        return d * jax.lax.rsqrt(var + LN_EPS) * gamma + beta

    # ---- gc1: 1x1 conv + einsum('nkctv,kvw->nctw') as a single matmul --------
    h = dot(x, m1)                                  # (Tb, V*Cout)

    # ---- norm1 + dropout (identity, p = 0) -----------------------------------
    h = group_layernorm(h, g1_ref[...], b1_ref[...])
    # TODO(synk): dropout treated as identity (eval mode / p == 0) for determinism.

    # ---- 1x1 conv (all vertices at once via block-diagonal operator) ---------
    h = dot(h, mc)

    # ---- gc2 ------------------------------------------------------------------
    h = dot(h, m2)

    # ---- norm2 + log_softmax over the vertex axis V ---------------------------
    y = group_layernorm(h, g2_ref[...], b2_ref[...])
    # Row-global max is a valid softmax stabilizer (>= every per-channel max); the
    # post-LayerNorm values are bounded so exp() cannot under/overflow harmfully.
    z = y - jnp.max(y, axis=-1, keepdims=True)
    s = dot(jnp.exp(z), Q)                          # sum over V for each channel, broadcast back
    o_ref[0] = (z - jnp.log(s)).astype(o_ref.dtype)


def _pick_t_block(T, cap=256):
    """Largest time-block <= cap dividing T and respecting the (8,128) block rule."""
    if T <= cap:
        return T
    for tb in range(cap, 7, -1):
        if T % tb == 0 and tb % 8 == 0:
            return tb
    return T


# ---------------------------------------------------------------------------
# Full GCN forward (single fused pallas_call)
# ---------------------------------------------------------------------------
@jax.jit
def gcn_forward(x_nctv, adj, params):
    """x_nctv: (N, Cin, T, V) like PyTorch; adj: (K, V, V).
    Returns PyTorch-layout output (N, V, T, Cout)."""
    N, Cin, T, V = x_nctv.shape
    K = adj.shape[0]
    Cout = params["gamma1"].shape[0]
    f32 = jnp.float32
    hi = jax.lax.Precision.HIGHEST

    # ---- one-off operator folding (tiny einsums, done in f32/HIGHEST) --------
    w1 = params["w_gc1"].reshape(K, Cout, Cin)        # gc1 conv weight (K, Cout, Cin)
    w2 = params["w_gc2"].reshape(K, Cout, Cout)       # gc2 conv weight (K, Cout, Cout)
    # M[(v,ci),(w,c)] = sum_k adj[k,v,w] * W[k*Cout+c, ci]
    M1 = jnp.einsum("kvw,kci->viwc", adj, w1, precision=hi).reshape(V * Cin, V * Cout)
    M2 = jnp.einsum("kvw,kci->viwc", adj, w2, precision=hi).reshape(V * Cout, V * Cout)
    # Block-diagonal 1x1 conv operator: Mc[(v,ci),(w,c)] = delta(v,w) * Wconv[c,ci]
    Mc = jnp.einsum("vw,ci->viwc", jnp.eye(V, dtype=f32),
                    params["w_conv"].astype(f32)).reshape(V * Cout, V * Cout)
    # LayerNorm group-mean projector and softmax vertex-sum operator (exact 0/1 values).
    P = jnp.kron(jnp.eye(V, dtype=f32), jnp.full((Cout, Cout), 1.0 / Cout, f32))
    Q = jnp.kron(jnp.full((V, V), 1.0, f32), jnp.eye(Cout, dtype=f32))
    g1 = jnp.tile(params["gamma1"].astype(f32), V).reshape(1, V * Cout)
    b1 = jnp.tile(params["beta1"].astype(f32), V).reshape(1, V * Cout)
    g2 = jnp.tile(params["gamma2"].astype(f32), V).reshape(1, V * Cout)
    b2 = jnp.tile(params["beta2"].astype(f32), V).reshape(1, V * Cout)

    # channels-last, vertex*channel flattened onto the lane axis
    xf = jnp.transpose(x_nctv, (0, 2, 3, 1)).reshape(N, T, V * Cin)

    Tb = _pick_t_block(T)
    nT = T // Tb
    VCi, VCo = V * Cin, V * Cout

    flops = int(N * T * (2 * VCi * VCo + 2 * 7 * VCo * VCo))
    transcend = int(N * T * VCo * 4)
    bytes_acc = int(4 * (N * T * (VCi + VCo) + VCi * VCo + 5 * VCo * VCo + 4 * VCo))

    const2d = lambda n, t: (0, 0)
    out_flat = pl.pallas_call(
        _fused_gcn_kernel,
        out_shape=jax.ShapeDtypeStruct((N, T, VCo), x_nctv.dtype),
        grid=(N, nT),
        in_specs=[
            pl.BlockSpec((1, Tb, VCi), lambda n, t: (n, t, 0)),
            pl.BlockSpec((VCi, VCo), const2d),   # M1 (constant across grid -> fetched once)
            pl.BlockSpec((VCo, VCo), const2d),   # Mc
            pl.BlockSpec((VCo, VCo), const2d),   # M2
            pl.BlockSpec((VCo, VCo), const2d),   # P
            pl.BlockSpec((VCo, VCo), const2d),   # Q
            pl.BlockSpec((1, VCo), const2d),     # gamma1 (tiled over V)
            pl.BlockSpec((1, VCo), const2d),     # beta1
            pl.BlockSpec((1, VCo), const2d),     # gamma2
            pl.BlockSpec((1, VCo), const2d),     # beta2
        ],
        out_specs=pl.BlockSpec((1, Tb, VCo), lambda n, t: (n, t, 0)),
        compiler_params=pltpu.CompilerParams(
            dimension_semantics=("parallel", "parallel"),
            vmem_limit_bytes=32 * 1024 * 1024),  # raise further if Tb / V*C grow
        cost_estimate=pl.CostEstimate(flops=flops, transcendentals=transcend,
                                      bytes_accessed=bytes_acc),
    )(xf, M1, Mc, M2, P, Q, g1, b1, g2, b2)

    # Layout plumbing back to PyTorch's output layout (N, V, T, Cout).
    return jnp.transpose(out_flat.reshape(N, T, V, Cout), (0, 2, 1, 3))


# Pure-JAX reference mirroring the PyTorch forward exactly (for verification).
def reference(x, adj, params):
    N, Cin, T, V = x.shape
    K = adj.shape[0]
    Cout = params["gamma1"].shape[0]
    pe = jax.lax.Precision.HIGHEST

    def gc(xin, w):
        y = jnp.einsum('nctv,dc->ndtv', xin, w, precision=pe)
        y = y.reshape(N, K, Cout, T, V)
        return jnp.einsum('nkctv,kvw->nctw', y, adj, precision=pe)

    def ln(xp, g, b):
        mu = xp.mean(-1, keepdims=True)
        var = ((xp - mu) ** 2).mean(-1, keepdims=True)
        return (xp - mu) / jnp.sqrt(var + LN_EPS) * g + b

    h = gc(x, params["w_gc1"])
    p = ln(jnp.transpose(h, (0, 3, 2, 1)), params["gamma1"], params["beta1"])
    q = jnp.transpose(p, (0, 3, 2, 1))
    q = jnp.einsum('nctv,dc->ndtv', q, params["w_conv"], precision=pe)
    r = gc(q, params["w_gc2"])
    s = ln(jnp.transpose(r, (0, 3, 2, 1)), params["gamma2"], params["beta2"])
    return jax.nn.log_softmax(s, axis=1)


if __name__ == "__main__":
    # Small deterministic shapes. The module's inner conv requires in_channels ==
    # out_channels for the forward to be well-defined.  V * C = 128 -> lane-dense tiles.
    N, Cin, Cout, T, V, K = 2, 8, 8, 4, 16, 3
    key = jax.random.PRNGKey(0)
    ks = jax.random.split(key, 8)

    x = jax.random.normal(ks[0], (N, Cin, T, V), jnp.float32)
    adj = jax.random.uniform(ks[1], (K, V, V), jnp.float32)

    params = dict(
        w_gc1=0.2 * jax.random.normal(ks[2], (K * Cout, Cin), jnp.float32),   # gc1.conv weight
        w_conv=0.2 * jax.random.normal(ks[3], (Cout, Cin), jnp.float32),      # self.conv weight
        w_gc2=0.2 * jax.random.normal(ks[4], (K * Cout, Cout), jnp.float32),  # gc2.conv weight
        gamma1=1.0 + 0.1 * jax.random.normal(ks[5], (Cout,), jnp.float32),    # norm1
        beta1=0.1 * jax.random.normal(ks[6], (Cout,), jnp.float32),
        gamma2=jnp.ones((Cout,), jnp.float32),                                # norm2 (torch defaults)
        beta2=jnp.zeros((Cout,), jnp.float32),
    )

    out = jax.block_until_ready(gcn_forward(x, adj, params))
    ref = jax.block_until_ready(reference(x, adj, params))

    assert out.shape == (N, V, T, Cout), out.shape
    np.testing.assert_allclose(np.asarray(out), np.asarray(ref), rtol=2e-3, atol=2e-3)
    print("KERNEL_OK")
</pallas_src>

<mosaic_0001>
module attributes {stable_mosaic.version = 11 : i64} {
  func.func @_fused_gcn_kernel(%arg0: i32, %arg1: i32, %arg2: memref<1x4x128xf32, #tpu.memory_space<vmem>>, %arg3: memref<128x128xf32, #tpu.memory_space<vmem>>, %arg4: memref<128x128xf32, #tpu.memory_space<vmem>>, %arg5: memref<128x128xf32, #tpu.memory_space<vmem>>, %arg6: memref<128x128xf32, #tpu.memory_space<vmem>>, %arg7: memref<128x128xf32, #tpu.memory_space<vmem>>, %arg8: memref<1x128xf32, #tpu.memory_space<vmem>>, %arg9: memref<1x128xf32, #tpu.memory_space<vmem>>, %arg10: memref<1x128xf32, #tpu.memory_space<vmem>>, %arg11: memref<1x128xf32, #tpu.memory_space<vmem>>, %arg12: memref<1x4x128xf32, #tpu.memory_space<vmem>>) attributes {dimension_semantics = [#tpu.dimension_semantics<parallel>, #tpu.dimension_semantics<parallel>], iteration_bounds = array<i64: 2, 1>, scalar_prefetch = 0 : i64, scratch_operands = 0 : i64, tpu.core_type = #tpu.core_type<tc>, window_params = [{transform_indices = @transform_0, window_bounds = array<i64: 1, 4, 128>}, {pipeline_mode = #tpu.pipeline_mode<synchronous>, transform_indices = @transform_1, window_bounds = array<i64: 128, 128>}, {pipeline_mode = #tpu.pipeline_mode<synchronous>, transform_indices = @transform_2, window_bounds = array<i64: 128, 128>}, {pipeline_mode = #tpu.pipeline_mode<synchronous>, transform_indices = @transform_3, window_bounds = array<i64: 128, 128>}, {pipeline_mode = #tpu.pipeline_mode<synchronous>, transform_indices = @transform_4, window_bounds = array<i64: 128, 128>}, {pipeline_mode = #tpu.pipeline_mode<synchronous>, transform_indices = @transform_5, window_bounds = array<i64: 128, 128>}, {pipeline_mode = #tpu.pipeline_mode<synchronous>, transform_indices = @transform_6, window_bounds = array<i64: 1, 128>}, {pipeline_mode = #tpu.pipeline_mode<synchronous>, transform_indices = @transform_7, window_bounds = array<i64: 1, 128>}, {pipeline_mode = #tpu.pipeline_mode<synchronous>, transform_indices = @transform_8, window_bounds = array<i64: 1, 128>}, {pipeline_mode = #tpu.pipeline_mode<synchronous>, transform_indices = @transform_9, window_bounds = array<i64: 1, 128>}, {transform_indices = @transform_10, window_bounds = array<i64: 1, 4, 128>}]} {
    %c0 = arith.constant 0 : index
    %c0_0 = arith.constant 0 : index
    %c0_1 = arith.constant 0 : index
    %0 = vector.load %arg2[%c0, %c0_0, %c0_1] : memref<1x4x128xf32, #tpu.memory_space<vmem>>, vector<1x4x128xf32>
    %1 = vector.shape_cast %0 : vector<1x4x128xf32> to vector<4x128xf32>
    %c0_2 = arith.constant 0 : index
    %c0_3 = arith.constant 0 : index
    %2 = vector.load %arg3[%c0_2, %c0_3] : memref<128x128xf32, #tpu.memory_space<vmem>>, vector<128x128xf32>
    %c0_4 = arith.constant 0 : index
    %c0_5 = arith.constant 0 : index
    %3 = vector.load %arg4[%c0_4, %c0_5] : memref<128x128xf32, #tpu.memory_space<vmem>>, vector<128x128xf32>
    %c0_6 = arith.constant 0 : index
    %c0_7 = arith.constant 0 : index
    %4 = vector.load %arg5[%c0_6, %c0_7] : memref<128x128xf32, #tpu.memory_space<vmem>>, vector<128x128xf32>
    %c0_8 = arith.constant 0 : index
    %c0_9 = arith.constant 0 : index
    %5 = vector.load %arg6[%c0_8, %c0_9] : memref<128x128xf32, #tpu.memory_space<vmem>>, vector<128x128xf32>
    %c0_10 = arith.constant 0 : index
    %c0_11 = arith.constant 0 : index
    %6 = vector.load %arg7[%c0_10, %c0_11] : memref<128x128xf32, #tpu.memory_space<vmem>>, vector<128x128xf32>
    %cst = arith.constant dense<0.000000e+00> : vector<4x128xf32>
    %7 = tpu.matmul %1, %2, %cst {dimension_numbers = #tpu.dot_dimension_numbers<[1], [0], [0], [1], [0, 0, 1, 1], [], []>} : vector<4x128xf32>, vector<128x128xf32>, vector<4x128xf32> -> vector<4x128xf32>
    %c0_12 = arith.constant 0 : index
    %c0_13 = arith.constant 0 : index
    %8 = vector.load %arg8[%c0_12, %c0_13] : memref<1x128xf32, #tpu.memory_space<vmem>>, vector<1x128xf32>
    %c0_14 = arith.constant 0 : index
    %c0_15 = arith.constant 0 : index
    %9 = vector.load %arg9[%c0_14, %c0_15] : memref<1x128xf32, #tpu.memory_space<vmem>>, vector<1x128xf32>
    %cst_16 = arith.constant dense<0.000000e+00> : vector<4x128xf32>
    %10 = tpu.matmul %7, %5, %cst_16 {dimension_numbers = #tpu.dot_dimension_numbers<[1], [0], [0], [1], [0, 0, 1, 1], [], []>} : vector<4x128xf32>, vector<128x128xf32>, vector<4x128xf32> -> vector<4x128xf32>
    %11 = arith.subf %7, %10 : vector<4x128xf32>
    %12 = arith.mulf %11, %11 : vector<4x128xf32>
    %cst_17 = arith.constant dense<0.000000e+00> : vector<4x128xf32>
    %13 = tpu.matmul %12, %5, %cst_17 {dimension_numbers = #tpu.dot_dimension_numbers<[1], [0], [0], [1], [0, 0, 1, 1], [], []>} : vector<4x128xf32>, vector<128x128xf32>, vector<4x128xf32> -> vector<4x128xf32>
    %cst_18 = arith.constant 9.99999974E-6 : f32
    %14 = vector.broadcast %cst_18 : f32 to vector<4x128xf32>
    %15 = arith.addf %13, %14 : vector<4x128xf32>
    %16 = math.rsqrt %15 : vector<4x128xf32>
    %17 = arith.mulf %11, %16 : vector<4x128xf32>
    %18 = vector.broadcast %8 : vector<1x128xf32> to vector<4x128xf32>
    %19 = arith.mulf %17, %18 : vector<4x128xf32>
    %20 = vector.broadcast %9 : vector<1x128xf32> to vector<4x128xf32>
    %21 = arith.addf %19, %20 : vector<4x128xf32>
    %cst_19 = arith.constant dense<0.000000e+00> : vector<4x128xf32>
    %22 = tpu.matmul %21, %3, %cst_19 {dimension_numbers = #tpu.dot_dimension_numbers<[1], [0], [0], [1], [0, 0, 1, 1], [], []>} : vector<4x128xf32>, vector<128x128xf32>, vector<4x128xf32> -> vector<4x128xf32>
    %cst_20 = arith.constant dense<0.000000e+00> : vector<4x128xf32>
    %23 = tpu.matmul %22, %4, %cst_20 {dimension_numbers = #tpu.dot_dimension_numbers<[1], [0], [0], [1], [0, 0, 1, 1], [], []>} : vector<4x128xf32>, vector<128x128xf32>, vector<4x128xf32> -> vector<4x128xf32>
    %c0_21 = arith.constant 0 : index
    %c0_22 = arith.constant 0 : index
    %24 = vector.load %arg10[%c0_21, %c0_22] : memref<1x128xf32, #tpu.memory_space<vmem>>, vector<1x128xf32>
    %c0_23 = arith.constant 0 : index
    %c0_24 = arith.constant 0 : index
    %25 = vector.load %arg11[%c0_23, %c0_24] : memref<1x128xf32, #tpu.memory_space<vmem>>, vector<1x128xf32>
    %cst_25 = arith.constant dense<0.000000e+00> : vector<4x128xf32>
    %26 = tpu.matmul %23, %5, %cst_25 {dimension_numbers = #tpu.dot_dimension_numbers<[1], [0], [0], [1], [0, 0, 1, 1], [], []>} : vector<4x128xf32>, vector<128x128xf32>, vector<4x128xf32> -> vector<4x128xf32>
    %27 = arith.subf %23, %26 : vector<4x128xf32>
    %28 = arith.mulf %27, %27 : vector<4x128xf32>
    %cst_26 = arith.constant dense<0.000000e+00> : vector<4x128xf32>
    %29 = tpu.matmul %28, %5, %cst_26 {dimension_numbers = #tpu.dot_dimension_numbers<[1], [0], [0], [1], [0, 0, 1, 1], [], []>} : vector<4x128xf32>, vector<128x128xf32>, vector<4x128xf32> -> vector<4x128xf32>
    %cst_27 = arith.constant 9.99999974E-6 : f32
    %30 = vector.broadcast %cst_27 : f32 to vector<4x128xf32>
    %31 = arith.addf %29, %30 : vector<4x128xf32>
    %32 = math.rsqrt %31 : vector<4x128xf32>
    %33 = arith.mulf %27, %32 : vector<4x128xf32>
    %34 = vector.broadcast %24 : vector<1x128xf32> to vector<4x128xf32>
    %35 = arith.mulf %33, %34 : vector<4x128xf32>
    %36 = vector.broadcast %25 : vector<1x128xf32> to vector<4x128xf32>
    %37 = arith.addf %35, %36 : vector<4x128xf32>
    %cst_28 = arith.constant dense<0xFF800000> : vector<4xf32>
    %38 = vector.multi_reduction <maximumf>, %37, %cst_28 [1] : vector<4x128xf32> to vector<4xf32>
    %39 = vector.shape_cast %38 : vector<4xf32> to vector<4x1xf32>
    %40 = vector.broadcast %39 : vector<4x1xf32> to vector<4x128xf32>
    %41 = arith.subf %37, %40 : vector<4x128xf32>
    %42 = math.exp %41 : vector<4x128xf32>
    %cst_29 = arith.constant dense<0.000000e+00> : vector<4x128xf32>
    %43 = tpu.matmul %42, %6, %cst_29 {dimension_numbers = #tpu.dot_dimension_numbers<[1], [0], [0], [1], [0, 0, 1, 1], [], []>} : vector<4x128xf32>, vector<128x128xf32>, vector<4x128xf32> -> vector<4x128xf32>
    %44 = math.log %43 : vector<4x128xf32>
    %45 = arith.subf %41, %44 : vector<4x128xf32>
    %c0_30 = arith.constant 0 : index
    %c0_31 = arith.constant 0 : index
    %c0_32 = arith.constant 0 : index
    %46 = vector.load %arg12[%c0_30, %c0_31, %c0_32] : memref<1x4x128xf32, #tpu.memory_space<vmem>>, vector<1x4x128xf32>
    %47 = vector.shape_cast %46 : vector<1x4x128xf32> to vector<4x128xf32>
    %48 = vector.shape_cast %45 : vector<4x128xf32> to vector<1x4x128xf32>
    tpu.vector_store %arg12[%c0_30, %c0_31, %c0_32], %48 {strides = array<i32>} : memref<1x4x128xf32, #tpu.memory_space<vmem>>, vector<1x4x128xf32>,
    return
  }
  func.func @transform_0(%arg0: i32, %arg1: i32) -> (i32, i32, i32) {
    %c0_i32 = arith.constant 0 : i32
    %c0_i32_0 = arith.constant 0 : i32
    return %arg0, %arg1, %c0_i32 : i32, i32, i32
  }
  func.func @transform_1(%arg0: i32, %arg1: i32) -> (i32, i32) {
    %c0_i32 = arith.constant 0 : i32
    %c0_i32_0 = arith.constant 0 : i32
    %c0_i32_1 = arith.constant 0 : i32
    return %c0_i32, %c0_i32_0 : i32, i32
  }
  func.func @transform_2(%arg0: i32, %arg1: i32) -> (i32, i32) {
    %c0_i32 = arith.constant 0 : i32
    %c0_i32_0 = arith.constant 0 : i32
    %c0_i32_1 = arith.constant 0 : i32
    return %c0_i32, %c0_i32_0 : i32, i32
  }
  func.func @transform_3(%arg0: i32, %arg1: i32) -> (i32, i32) {
    %c0_i32 = arith.constant 0 : i32
    %c0_i32_0 = arith.constant 0 : i32
    %c0_i32_1 = arith.constant 0 : i32
    return %c0_i32, %c0_i32_0 : i32, i32
  }
  func.func @transform_4(%arg0: i32, %arg1: i32) -> (i32, i32) {
    %c0_i32 = arith.constant 0 : i32
    %c0_i32_0 = arith.constant 0 : i32
    %c0_i32_1 = arith.constant 0 : i32
    return %c0_i32, %c0_i32_0 : i32, i32
  }
  func.func @transform_5(%arg0: i32, %arg1: i32) -> (i32, i32) {
    %c0_i32 = arith.constant 0 : i32
    %c0_i32_0 = arith.constant 0 : i32
    %c0_i32_1 = arith.constant 0 : i32
    return %c0_i32, %c0_i32_0 : i32, i32
  }
  func.func @transform_6(%arg0: i32, %arg1: i32) -> (i32, i32) {
    %c0_i32 = arith.constant 0 : i32
    %c0_i32_0 = arith.constant 0 : i32
    %c0_i32_1 = arith.constant 0 : i32
    return %c0_i32, %c0_i32_0 : i32, i32
  }
  func.func @transform_7(%arg0: i32, %arg1: i32) -> (i32, i32) {
    %c0_i32 = arith.constant 0 : i32
    %c0_i32_0 = arith.constant 0 : i32
    %c0_i32_1 = arith.constant 0 : i32
    return %c0_i32, %c0_i32_0 : i32, i32
  }
  func.func @transform_8(%arg0: i32, %arg1: i32) -> (i32, i32) {
    %c0_i32 = arith.constant 0 : i32
    %c0_i32_0 = arith.constant 0 : i32
    %c0_i32_1 = arith.constant 0 : i32
    return %c0_i32, %c0_i32_0 : i32, i32
  }
  func.func @transform_9(%arg0: i32, %arg1: i32) -> (i32, i32) {
    %c0_i32 = arith.constant 0 : i32
    %c0_i32_0 = arith.constant 0 : i32
    %c0_i32_1 = arith.constant 0 : i32
    return %c0_i32, %c0_i32_0 : i32, i32
  }
  func.func @transform_10(%arg0: i32, %arg1: i32) -> (i32, i32, i32) {
    %c0_i32 = arith.constant 0 : i32
    %c0_i32_0 = arith.constant 0 : i32
    return %arg0, %arg1, %c0_i32 : i32, i32, i32
  }
}

</mosaic_0001>

<llo_original>
// kernel: tile.23
$region0: #{tile.23}
  #allocation0 [shape = 's32[1]{0}', space=sflag, size = 0x4, scoped, tag = 'scoped memory for tile.23']
  %s0 = inlined_call_operand.vmem [shape: f32[8], index: 0, kind: input, shape index: {}]
  %s1 = inlined_call_operand.vmem [shape: f32[16,8], index: 1, kind: output, shape index: {}]
  // Predicated region
  $region2: #{tile.23} parent=0 // pred_check
    _
  $region3: #{tile.23} parent=0 // pred_check_branch
    %3 = sbr.rel (0) target = $region5
  $region4: #{tile.23} parent=0 // pred_region
    _
  $region5: #{tile.23} parent=0 // pred_fallthru
    _
  %v4 = vld [vmem:[%s0] ss:$0 sm:$0xff]
  %5 = vst [vmem:[%s1] sm:$0xff] %v4
  %s6 = scalar_lea.vmem %s1, 8
  %7 = vst [vmem:[%s6] sm:$0xff] %v4

// kernel: tile.24
$region0: #{tile.24}
  %s0 = inlined_call_operand.vmem [shape: f32[16,8], index: 0, kind: input, shape index: {}]
  %s1 = inlined_call_operand.vmem [shape: f32[1,128], index: 1, kind: output, shape index: {}]
  $region1: #{tile.24} parent=0
    #allocation0 [shape = 'u8[4096]{0}', space=vmem, size = 0x1000, scoped, tag = 'scoped mem for output reshape']
    %v2 = vld [vmem:[%s0] sm:$0x1]
    %vm3 = vcmask 64512
    %4 = vst.msk [vmem:[#allocation0] sm:$0x1] %vm3, %v2
    %s5 = scalar_lea.vmem %s0, 15
    %v6 = vld [vmem:[%s5] sm:$0x1]
    %7 = vrot.lane.b32.xlu0 %v6, 120
    %v8 = vpop.permute.xlu0 %7
    %vm9 = vcmask 1048512
    %10 = vst.msk [vmem:[#allocation0] sm:$0x1] %vm9, %v8
    %s11 = scalar_lea.vmem %s0, 14
    %v12 = vld [vmem:[%s11] sm:$0x1]
    %13 = vrot.lane.b32.xlu0 %v12, 112
    %v14 = vpop.permute.xlu0 %13
    %vm15 = vcmask 982912
    %16 = vst.msk [vmem:[#allocation0] sm:$0x1] %vm15, %v14
    %s17 = scalar_lea.vmem %s0, 13
    %v18 = vld [vmem:[%s17] sm:$0x1]
    %19 = vrot.lane.b32.xlu0 %v18, 104
    %v20 = vpop.permute.xlu0 %19
    %vm21 = vcmask 917312
    %22 = vst.msk [vmem:[#allocation0] sm:$0x1] %vm21, %v20
    %s23 = scalar_lea.vmem %s0, 12
    %v24 = vld [vmem:[%s23] sm:$0x1]
    %25 = vrot.lane.b32.xlu0 %v24, 96
    %v26 = vpop.permute.xlu0 %25
    %vm27 = vcmask 851712
    %28 = vst.msk [vmem:[#allocation0] sm:$0x1] %vm27, %v26
    %s29 = scalar_lea.vmem %s0, 11
    %v30 = vld [vmem:[%s29] sm:$0x1]
    %31 = vrot.lane.b32.xlu0 %v30, 88
    %v32 = vpop.permute.xlu0 %31
    %vm33 = vcmask 786112
    %34 = vst.msk [vmem:[#allocation0] sm:$0x1] %vm33, %v32
    %s35 = scalar_lea.vmem %s0, 10
    %v36 = vld [vmem:[%s35] sm:$0x1]
    %37 = vrot.lane.b32.xlu0 %v36, 80
    %v38 = vpop.permute.xlu0 %37
    %vm39 = vcmask 720512
    %40 = vst.msk [vmem:[#allocation0] sm:$0x1] %vm39, %v38
    %s41 = scalar_lea.vmem %s0, 9
    %v42 = vld [vmem:[%s41] sm:$0x1]
    %43 = vrot.lane.b32.xlu0 %v42, 72
    %v44 = vpop.permute.xlu0 %43
    %vm45 = vcmask 654912
    %46 = vst.msk [vmem:[#allocation0] sm:$0x1] %vm45, %v44
    %s47 = scalar_lea.vmem %s0, 8
    %v48 = vld [vmem:[%s47] sm:$0x1]
    %49 = vrot.lane.b32.xlu0 %v48, 64
    %v50 = vpop.permute.xlu0 %49
    %vm51 = vcmask 589312
    %52 = vst.msk [vmem:[#allocation0] sm:$0x1] %vm51, %v50
    %s53 = scalar_lea.vmem %s0, 7
    %v54 = vld [vmem:[%s53] sm:$0x1]
    %55 = vrot.lane.b32.xlu0 %v54, 56
    %v56 = vpop.permute.xlu0 %55
    %vm57 = vcmask 523712
    %58 = vst.msk [vmem:[#allocation0] sm:$0x1] %vm57, %v56
    %s59 = scalar_lea.vmem %s0, 6
    %v60 = vld [vmem:[%s59] sm:$0x1]
    %61 = vrot.lane.b32.xlu0 %v60, 48
    %v62 = vpop.permute.xlu0 %61
    %vm63 = vcmask 458112
    %64 = vst.msk [vmem:[#allocation0] sm:$0x1] %vm63, %v62
    %s65 = scalar_lea.vmem %s0, 5
    %v66 = vld [vmem:[%s65] sm:$0x1]
    %67 = vrot.lane.b32.xlu0 %v66, 40
    %v68 = vpop.permute.xlu0 %67
    %vm69 = vcmask 392512
    %70 = vst.msk [vmem:[#allocation0] sm:$0x1] %vm69, %v68
    %s71 = scalar_lea.vmem %s0, 4
    %v72 = vld [vmem:[%s71] sm:$0x1]
    %73 = vrot.lane.b32.xlu0 %v72, 32
    %v74 = vpop.permute.xlu0 %73
    %vm75 = vcmask 326912
    %76 = vst.msk [vmem:[#allocation0] sm:$0x1] %vm75, %v74
    %s77 = scalar_lea.vmem %s0, 3
    %v78 = vld [vmem:[%s77] sm:$0x1]
    %79 = vrot.lane.b32.xlu0 %v78, 24
    %v80 = vpop.permute.xlu0 %79
    %vm81 = vcmask 261312
    %82 = vst.msk [vmem:[#allocation0] sm:$0x1] %vm81, %v80
    %s83 = scalar_lea.vmem %s0, 2
    %v84 = vld [vmem:[%s83] sm:$0x1]
    %85 = vrot.lane.b32.xlu0 %v84, 16
    %v86 = vpop.permute.xlu0 %85
    %vm87 = vcmask 195712
    %88 = vst.msk [vmem:[#allocation0] sm:$0x1] %vm87, %v86
    %s89 = scalar_lea.vmem %s0, 1
    %v90 = vld [vmem:[%s89] sm:$0x1]
    %91 = vrot.lane.b32.xlu0 %v90, 8
    %v92 = vpop.permute.xlu0 %91
    %vm93 = vcmask 130112
    %94 = vst.msk [vmem:[#allocation0] sm:$0x1] %vm93, %v92
    %s96 = sshllo.u32 0, 1
    %v98 = vld [vmem:[#allocation0] sm:%s96]
    %s99 = sshllo.u32 0, 1
    %100 = vst [vmem:[%s1] sm:%s99] %v98

// kernel: gcn_forward.1
$region0: #{gcn_forward.1}
  #allocation0 [shape = 'u32[]', space=smem, size = 0x4, offset = 0x4, fixed_abs, tag = 'smem constant byte address 0x4 - core index']
  #allocation1 [shape = 'u32[144,128]{1,0:T(1,128)}', space=vmem, size = 0x12000, scoped, tag = 'internal scratch']
  %s0 = inlined_call_operand.vmem [shape: f32[2,4,128], index: 0, kind: input, shape index: {}]
  %s1 = inlined_call_operand.vmem [shape: f32[128,128], index: 1, kind: input, shape index: {}]
  %s2 = inlined_call_operand.vmem [shape: f32[128,128], index: 2, kind: input, shape index: {}]
  %s3 = inlined_call_operand.vmem [shape: f32[128,128], index: 3, kind: input, shape index: {}]
  %s4 = inlined_call_operand.vmem [shape: f32[128,128], index: 4, kind: input, shape index: {}]
  %s5 = inlined_call_operand.vmem [shape: f32[128,128], index: 5, kind: input, shape index: {}]
  %s6 = inlined_call_operand.vmem [shape: f32[1,128], index: 6, kind: input, shape index: {}]
  %s7 = inlined_call_operand.vmem [shape: f32[1,128], index: 7, kind: input, shape index: {}]
  %s8 = inlined_call_operand.vmem [shape: f32[1,128], index: 8, kind: input, shape index: {}]
  %s9 = inlined_call_operand.vmem [shape: f32[1,128], index: 9, kind: input, shape index: {}]
  %s10 = inlined_call_operand.vmem [shape: f32[2,4,128], index: 10, kind: output, shape index: {}]
  %s11 = sld [smem:[#allocation0]]
  $region73: #{gcn_forward.1} parent=0
    _
  %s13 = ssub.s32 1, %s11
  %s14 = scalar_select 0, %s13, %s11
  loop: start=0, step=1, limit=4
  $region2: #{gcn_forward.1} parent=0 // loop_pre_header
    _
  $region3: #{gcn_forward.1} parent=0 // loop_header
    %s16 = sphi 0, %s20
    %p17 = scmp.ge.s32.totalorder %s16, 4
    %s23 = sphi 0, %s35
    %s24 = sphi 0, %s31
    %s25 = sphi 0, %s23
    %s26 = sphi 0, %s24
    %s27 = sphi 0, %s25
    %s28 = sphi 0, %s26
    %s40 = sphi 0, %s42
    %s43 = sphi 0, %s40
    %s44 = sphi 0, %s43
    %s60 = sphi 0, %s44
    %s64 = sphi 0, %s64
    %s66 = sphi 0, %s64
    %s67 = sphi 0, %s66
    %s81 = sphi 0, %s67
    %s85 = sphi 0, %s85
    %s87 = sphi 0, %s85
    %s88 = sphi 0, %s87
    %s102 = sphi 0, %s88
    %s106 = sphi 0, %s106
    %s108 = sphi 0, %s106
    %s109 = sphi 0, %s108
    %s123 = sphi 0, %s109
    %s127 = sphi 0, %s127
    %s129 = sphi 0, %s127
    %s130 = sphi 0, %s129
    %s144 = sphi 0, %s130
    %s148 = sphi 0, %s148
    %s150 = sphi 0, %s148
    %s151 = sphi 0, %s150
    %s165 = sphi 0, %s151
    %s169 = sphi 0, %s169
    %s171 = sphi 0, %s169
    %s172 = sphi 0, %s171
    %s186 = sphi 0, %s172
    %s190 = sphi 0, %s190
    %s192 = sphi 0, %s190
    %s193 = sphi 0, %s192
    %s207 = sphi 0, %s193
    %s211 = sphi 0, %s211
    %s213 = sphi 0, %s211
    %s214 = sphi 0, %s213
    %s228 = sphi 0, %s214
    %s232 = sphi 0, %s232
    %s234 = sphi 0, %s232
    %s235 = sphi 0, %s234
    %s249 = sphi 0, %s235
    %s257 = sphi 0, %s259
    %s260 = sphi 0, %s257
    %s261 = sphi 0, %s260
    %s277 = sphi 0, %s261
  $region4: #{gcn_forward.1} parent=0 // loop_header_branch
    %19 = sbr.rel (%p17) target = $region8
  $region5: #{gcn_forward.1} parent=0 // loop_body
    %s21 = ssub.s32 %s16, 1
    %s22 = ssub.s32 %s16, 2
    %s29 = sadd.s32 1, %s24
    %p30 = scmp.ge.s32.totalorder %s29, 1
    %s31 = scalar_select %p30, 0, %s29
    %s32 = sadd.s32 1, %s23
    %s33 = scalar_select %p30, %s32, %s23
    %p34 = scmp.ge.s32.totalorder %s33, 2
    %s35 = scalar_select %p34, 0, %s33
    %s36 = ssub.s32 %s23, %s35
    %s37 = ssub.s32 %s24, %s31
    %s38 = sor.u32 %s36, %s37
    %p39 = scmp.eq.s32.totalorder %s38, 0
    %s41 = sadd.s32 %s40, 1
    %s42 = scalar_select %p39, %s40, %s41
    %p45 = pneg %p39
    %p46 = scmp.eq.s32.totalorder %s16, 1
    %p47 = por %p45, %p46
    %p48 = scmp.ne.s32.totalorder %s40, %s43
    %p49 = scmp.eq.s32.totalorder %s16, 0
    %p50 = por %p48, %p49
    %p51 = scmp.ne.s32.totalorder %s40, %s43
    %p52 = scmp.eq.s32.totalorder %s21, 1
    %p53 = por %p51, %p52
    %p54 = scmp.ne.s32.totalorder %s43, %s44
    %p55 = scmp.eq.s32.totalorder %s21, 0
    %p56 = por %p54, %p55
    %p57 = scmp.ne.s32.totalorder %s43, %s44
    %p58 = scmp.eq.s32.totalorder %s22, 1
    %p59 = por %p57, %p58
    %p61 = scmp.ne.s32.totalorder %s44, %s60
    %p62 = scmp.eq.s32.totalorder %s22, 0
    %p63 = por %p61, %p62
    %s65 = sadd.s32 %s64, 1
    %p68 = scmp.eq.s32.totalorder %s16, 1
    %p69 = scmp.ne.s32.totalorder %s64, %s66
    %p70 = scmp.eq.s32.totalorder %s16, 0
    %p71 = por %p69, %p70
    %p72 = scmp.ne.s32.totalorder %s64, %s66
    %p73 = scmp.eq.s32.totalorder %s21, 1
    %p74 = por %p72, %p73
    %p75 = scmp.ne.s32.totalorder %s66, %s67
    %p76 = scmp.eq.s32.totalorder %s21, 0
    %p77 = por %p75, %p76
    %p78 = scmp.ne.s32.totalorder %s66, %s67
    %p79 = scmp.eq.s32.totalorder %s22, 1
    %p80 = por %p78, %p79
    %p82 = scmp.ne.s32.totalorder %s67, %s81
    %p83 = scmp.eq.s32.totalorder %s22, 0
    %p84 = por %p82, %p83
    %s86 = sadd.s32 %s85, 1
    %p89 = scmp.eq.s32.totalorder %s16, 1
    %p90 = scmp.ne.s32.totalorder %s85, %s87
    %p91 = scmp.eq.s32.totalorder %s16, 0
    %p92 = por %p90, %p91
    %p93 = scmp.ne.s32.totalorder %s85, %s87
    %p94 = scmp.eq.s32.totalorder %s21, 1
    %p95 = por %p93, %p94
    %p96 = scmp.ne.s32.totalorder %s87, %s88
    %p97 = scmp.eq.s32.totalorder %s21, 0
    %p98 = por %p96, %p97
    %p99 = scmp.ne.s32.totalorder %s87, %s88
    %p100 = scmp.eq.s32.totalorder %s22, 1
    %p101 = por %p99, %p100
    %p103 = scmp.ne.s32.totalorder %s88, %s102
    %p104 = scmp.eq.s32.totalorder %s22, 0
    %p105 = por %p103, %p104
    %s107 = sadd.s32 %s106, 1
    %p110 = scmp.eq.s32.totalorder %s16, 1
    %p111 = scmp.ne.s32.totalorder %s106, %s108
    %p112 = scmp.eq.s32.totalorder %s16, 0
    %p113 = por %p111, %p112
    %p114 = scmp.ne.s32.totalorder %s106, %s108
    %p115 = scmp.eq.s32.totalorder %s21, 1
    %p116 = por %p114, %p115
    %p117 = scmp.ne.s32.totalorder %s108, %s109
    %p118 = scmp.eq.s32.totalorder %s21, 0
    %p119 = por %p117, %p118
    %p120 = scmp.ne.s32.totalorder %s108, %s109
    %p121 = scmp.eq.s32.totalorder %s22, 1
    %p122 = por %p120, %p121
    %p124 = scmp.ne.s32.totalorder %s109, %s123
    %p125 = scmp.eq.s32.totalorder %s22, 0
    %p126 = por %p124, %p125
    %s128 = sadd.s32 %s127, 1
    %p131 = scmp.eq.s32.totalorder %s16, 1
    %p132 = scmp.ne.s32.totalorder %s127, %s129
    %p133 = scmp.eq.s32.totalorder %s16, 0
    %p134 = por %p132, %p133
    %p135 = scmp.ne.s32.totalorder %s127, %s129
    %p136 = scmp.eq.s32.totalorder %s21, 1
    %p137 = por %p135, %p136
    %p138 = scmp.ne.s32.totalorder %s129, %s130
    %p139 = scmp.eq.s32.totalorder %s21, 0
    %p140 = por %p138, %p139
    %p141 = scmp.ne.s32.totalorder %s129, %s130
    %p142 = scmp.eq.s32.totalorder %s22, 1
    %p143 = por %p141, %p142
    %p145 = scmp.ne.s32.totalorder %s130, %s144
    %p146 = scmp.eq.s32.totalorder %s22, 0
    %p147 = por %p145, %p146
    %s149 = sadd.s32 %s148, 1
    %p152 = scmp.eq.s32.totalorder %s16, 1
    %p153 = scmp.ne.s32.totalorder %s148, %s150
    %p154 = scmp.eq.s32.totalorder %s16, 0
    %p155 = por %p153, %p154
    %p156 = scmp.ne.s32.totalorder %s148, %s150
    %p157 = scmp.eq.s32.totalorder %s21, 1
    %p158 = por %p156, %p157
    %p159 = scmp.ne.s32.totalorder %s150, %s151
    %p160 = scmp.eq.s32.totalorder %s21, 0
    %p161 = por %p159, %p160
    %p162 = scmp.ne.s32.totalorder %s150, %s151
    %p163 = scmp.eq.s32.totalorder %s22, 1
    %p164 = por %p162, %p163
    %p166 = scmp.ne.s32.totalorder %s151, %s165
    %p167 = scmp.eq.s32.totalorder %s22, 0
    %p168 = por %p166, %p167
    %s170 = sadd.s32 %s169, 1
    %p173 = scmp.eq.s32.totalorder %s16, 1
    %p174 = scmp.ne.s32.totalorder %s169, %s171
    %p175 = scmp.eq.s32.totalorder %s16, 0
    %p176 = por %p174, %p175
    %p177 = scmp.ne.s32.totalorder %s169, %s171
    %p178 = scmp.eq.s32.totalorder %s21, 1
    %p179 = por %p177, %p178
    %p180 = scmp.ne.s32.totalorder %s171, %s172
    %p181 = scmp.eq.s32.totalorder %s21, 0
    %p182 = por %p180, %p181
    %p183 = scmp.ne.s32.totalorder %s171, %s172
    %p184 = scmp.eq.s32.totalorder %s22, 1
    %p185 = por %p183, %p184
    %p187 = scmp.ne.s32.totalorder %s172, %s186
    %p188 = scmp.eq.s32.totalorder %s22, 0
    %p189 = por %p187, %p188
    %s191 = sadd.s32 %s190, 1
    %p194 = scmp.eq.s32.totalorder %s16, 1
    %p195 = scmp.ne.s32.totalorder %s190, %s192
    %p196 = scmp.eq.s32.totalorder %s16, 0
    %p197 = por %p195, %p196
    %p198 = scmp.ne.s32.totalorder %s190, %s192
    %p199 = scmp.eq.s32.totalorder %s21, 1
    %p200 = por %p198, %p199
    %p201 = scmp.ne.s32.totalorder %s192, %s193
    %p202 = scmp.eq.s32.totalorder %s21, 0
    %p203 = por %p201, %p202
    %p204 = scmp.ne.s32.totalorder %s192, %s193
    %p205 = scmp.eq.s32.totalorder %s22, 1
    %p206 = por %p204, %p205
    %p208 = scmp.ne.s32.totalorder %s193, %s207
    %p209 = scmp.eq.s32.totalorder %s22, 0
    %p210 = por %p208, %p209
    %s212 = sadd.s32 %s211, 1
    %p215 = scmp.eq.s32.totalorder %s16, 1
    %p216 = scmp.ne.s32.totalorder %s211, %s213
    %p217 = scmp.eq.s32.totalorder %s16, 0
    %p218 = por %p216, %p217
    %p219 = scmp.ne.s32.totalorder %s211, %s213
    %p220 = scmp.eq.s32.totalorder %s21, 1
    %p221 = por %p219, %p220
    %p222 = scmp.ne.s32.totalorder %s213, %s214
    %p223 = scmp.eq.s32.totalorder %s21, 0
    %p224 = por %p222, %p223
    %p225 = scmp.ne.s32.totalorder %s213, %s214
    %p226 = scmp.eq.s32.totalorder %s22, 1
    %p227 = por %p225, %p226
    %p229 = scmp.ne.s32.totalorder %s214, %s228
    %p230 = scmp.eq.s32.totalorder %s22, 0
    %p231 = por %p229, %p230
    %s233 = sadd.s32 %s232, 1
    %p236 = scmp.eq.s32.totalorder %s16, 1
    %p237 = scmp.ne.s32.totalorder %s232, %s234
    %p238 = scmp.eq.s32.totalorder %s16, 0
    %p239 = por %p237, %p238
    %p240 = scmp.ne.s32.totalorder %s232, %s234
    %p241 = scmp.eq.s32.totalorder %s21, 1
    %p242 = por %p240, %p241
    %p243 = scmp.ne.s32.totalorder %s234, %s235
    %p244 = scmp.eq.s32.totalorder %s21, 0
    %p245 = por %p243, %p244
    %p246 = scmp.ne.s32.totalorder %s234, %s235
    %p247 = scmp.eq.s32.totalorder %s22, 1
    %p248 = por %p246, %p247
    %p250 = scmp.ne.s32.totalorder %s235, %s249
    %p251 = scmp.eq.s32.totalorder %s22, 0
    %p252 = por %p250, %p251
    %s253 = ssub.s32 %s23, %s35
    %s254 = ssub.s32 %s24, %s31
    %s255 = sor.u32 %s253, %s254
    %p256 = scmp.eq.s32.totalorder %s255, 0
    %s258 = sadd.s32 %s257, 1
    %s259 = scalar_select %p256, %s257, %s258
    %p262 = pneg %p256
    %p263 = scmp.eq.s32.totalorder %s16, 1
    %p264 = por %p262, %p263
    %p265 = scmp.ne.s32.totalorder %s257, %s260
    %p266 = scmp.eq.s32.totalorder %s16, 0
    %p267 = por %p265, %p266
    %p268 = scmp.ne.s32.totalorder %s257, %s260
    %p269 = scmp.eq.s32.totalorder %s21, 1
    %p270 = por %p268, %p269
    %p271 = scmp.ne.s32.totalorder %s260, %s261
    %p272 = scmp.eq.s32.totalorder %s21, 0
    %p273 = por %p271, %p272
    %p274 = scmp.ne.s32.totalorder %s260, %s261
    %p275 = scmp.eq.s32.totalorder %s22, 1
    %p276 = por %p274, %p275
    %p278 = scmp.ne.s32.totalorder %s261, %s277
    %p279 = scmp.eq.s32.totalorder %s22, 0
    %p280 = por %p278, %p279
    %p281 = scmp.le.s32.totalorder 1, %s16
    %p282 = scmp.lt.s32.totalorder %s16, 3
    %p283 = pnand %p281, %p282
    %p284 = pneg %p283
    // Predicated region
    $region9: #{gcn_forward.1} parent=5 // pred_check
      _
    $region10: #{gcn_forward.1} parent=5 // pred_check_branch
      %286 = sbr.rel (%p283) target = $region12
    $region11: #{gcn_forward.1} parent=5 // pred_region
      %s287 = ssub.s32 %s16, 1
      // Predicated region
      $region13: #{gcn_forward.1} parent=11 // pred_check
        %p288 = pneg %p77
      $region14: #{gcn_forward.1} parent=11 // pred_check_branch
        %290 = sbr.rel (%p288) target = $region16
      $region15: #{gcn_forward.1} parent=11 // pred_region
        _
      $region16: #{gcn_forward.1} parent=11 // pred_fallthru
        _
      // Predicated region
      $region17: #{gcn_forward.1} parent=11 // pred_check
        %p291 = pneg %p98
      $region18: #{gcn_forward.1} parent=11 // pred_check_branch
        %293 = sbr.rel (%p291) target = $region20
      $region19: #{gcn_forward.1} parent=11 // pred_region
        _
      $region20: #{gcn_forward.1} parent=11 // pred_fallthru
        _
      // Predicated region
      $region21: #{gcn_forward.1} parent=11 // pred_check
        %p294 = pneg %p119
      $region22: #{gcn_forward.1} parent=11 // pred_check_branch
        %296 = sbr.rel (%p294) target = $region24
      $region23: #{gcn_forward.1} parent=11 // pred_region
        _
      $region24: #{gcn_forward.1} parent=11 // pred_fallthru
        _
      // Predicated region
      $region25: #{gcn_forward.1} parent=11 // pred_check
        %p297 = pneg %p140
      $region26: #{gcn_forward.1} parent=11 // pred_check_branch
        %299 = sbr.rel (%p297) target = $region28
      $region27: #{gcn_forward.1} parent=11 // pred_region
        _
      $region28: #{gcn_forward.1} parent=11 // pred_fallthru
        _
      // Predicated region
      $region29: #{gcn_forward.1} parent=11 // pred_check
        %p300 = pneg %p161
      $region30: #{gcn_forward.1} parent=11 // pred_check_branch
        %302 = sbr.rel (%p300) target = $region32
      $region31: #{gcn_forward.1} parent=11 // pred_region
        _
      $region32: #{gcn_forward.1} parent=11 // pred_fallthru
        _
      // Predicated region
      $region33: #{gcn_forward.1} parent=11 // pred_check
        %p303 = pneg %p182
      $region34: #{gcn_forward.1} parent=11 // pred_check_branch
        %305 = sbr.rel (%p303) target = $region36
      $region35: #{gcn_forward.1} parent=11 // pred_region
        _
      $region36: #{gcn_forward.1} parent=11 // pred_fallthru
        _
      // Predicated region
      $region37: #{gcn_forward.1} parent=11 // pred_check
        %p306 = pneg %p203
      $region38: #{gcn_forward.1} parent=11 // pred_check_branch
        %308 = sbr.rel (%p306) target = $region40
      $region39: #{gcn_forward.1} parent=11 // pred_region
        _
      $region40: #{gcn_forward.1} parent=11 // pred_fallthru
        _
      // Predicated region
      $region41: #{gcn_forward.1} parent=11 // pred_check
        %p309 = pneg %p224
      $region42: #{gcn_forward.1} parent=11 // pred_check_branch
        %311 = sbr.rel (%p309) target = $region44
      $region43: #{gcn_forward.1} parent=11 // pred_region
        _
      $region44: #{gcn_forward.1} parent=11 // pred_fallthru
        _
      // Predicated region
      $region45: #{gcn_forward.1} parent=11 // pred_check
        %p312 = pneg %p245
      $region46: #{gcn_forward.1} parent=11 // pred_check_branch
        %314 = sbr.rel (%p312) target = $region48
      $region47: #{gcn_forward.1} parent=11 // pred_region
        _
      $region48: #{gcn_forward.1} parent=11 // pred_fallthru
        _
    $region12: #{gcn_forward.1} parent=5 // pred_fallthru
      _
    %p315 = scmp.lt.s32.totalorder %s16, 2
    // Predicated region
    $region49: #{gcn_forward.1} parent=5 // pred_check
      %p316 = pneg %p315
    $region50: #{gcn_forward.1} parent=5 // pred_check_branch
      %318 = sbr.rel (%p316) target = $region52
    $region51: #{gcn_forward.1} parent=5 // pred_region
      // Predicated region
      $region53: #{gcn_forward.1} parent=51 // pred_check
        %p319 = pneg %p50
      $region54: #{gcn_forward.1} parent=51 // pred_check_branch
        %321 = sbr.rel (%p319) target = $region56
      $region55: #{gcn_forward.1} parent=51 // pred_region
        %p322 = scmp.lt.s32.totalorder %s23, 1
        %s323 = scalar_select %p322, %s23, 1
        %p324 = scmp.lt.s32.totalorder %s24, 0
        %s325 = scalar_select %p324, %s24, 0
        %s326 = sadd.s32 %s325, %s323
        %s327 = smul.addr %s326, 4
        %s328 = scalar_lea.vmem %s0, %s327
      $region56: #{gcn_forward.1} parent=51 // pred_fallthru
        _
    $region52: #{gcn_forward.1} parent=5 // pred_fallthru
      _
    %p329 = scmp.le.s32.totalorder 1, %s16
    %p330 = scmp.lt.s32.totalorder %s16, 3
    %p331 = pnand %p329, %p330
    %p332 = pneg %p331
    // Predicated region
    $region57: #{gcn_forward.1} parent=5 // pred_check
      _
    $region58: #{gcn_forward.1} parent=5 // pred_check_branch
      %334 = sbr.rel (%p331) target = $region60
    $region59: #{gcn_forward.1} parent=5 // pred_region
      %s335 = ssub.s32 %s16, 1
      %p336 = scmp.lt.s32.totalorder %s25, 1
      %s337 = scalar_select %p336, %s25, 1
      %p338 = scmp.lt.s32.totalorder %s26, 0
      %s339 = scalar_select %p338, %s26, 0
      %s340 = sadd.s32 %s339, %s337
      %s341 = smul.addr %s340, 4
      %s342 = scalar_lea.vmem %s0, %s341
      %p343 = pneg %p56
      %p344 = pneg %p53
      %p345 = pneg %p77
      %p346 = pneg %p74
      %p347 = pneg %p98
      %p348 = pneg %p95
      %p349 = pneg %p119
      %p350 = pneg %p116
      %p351 = pneg %p140
      %p352 = pneg %p137
      %p353 = pneg %p161
      %p354 = pneg %p158
      %p355 = pneg %p182
      %p356 = pneg %p179
      %p357 = pneg %p203
      %p358 = pneg %p200
      %p359 = pneg %p224
      %p360 = pneg %p221
      %p361 = pneg %p245
      %p362 = pneg %p242
      %p363 = pneg %p273
      %p364 = pneg %p270
      %p365 = scmp.lt.s32.totalorder %s25, 1
      %s366 = scalar_select %p365, %s25, 1
      %p367 = scmp.lt.s32.totalorder %s26, 0
      %s368 = scalar_select %p367, %s26, 0
      %s369 = sadd.s32 %s368, %s366
      %s370 = smul.addr %s369, 4
      %s371 = scalar_lea.vmem %s10, %s370
      %p372 = scmp.lt.s32.totalorder %s25, 1
      %s373 = scalar_select %p372, %s25, 1
      %p374 = scmp.lt.s32.totalorder %s26, 0
      %s375 = scalar_select %p374, %s26, 0
      %s376 = sadd.s32 %s375, %s373
      %s377 = smul.addr %s376, 4
      %s378 = scalar_lea.vmem %s0, %s377
      %p379 = scmp.lt.s32.totalorder %s25, 1
      %s380 = scalar_select %p379, %s25, 1
      %p381 = scmp.lt.s32.totalorder %s26, 0
      %s382 = scalar_select %p381, %s26, 0
      %s383 = sadd.s32 %s382, %s380
      %s384 = smul.addr %s383, 4
      %s385 = scalar_lea.vmem %s10, %s384
      %v386 = vld [vmem:[%s378] sm:$0xf]
      %v387 = vld [vmem:[%s1] sm:$0xff]
      %v388 = vld [vmem:[%s1 + $0x8] sm:$0xff]
      %v389 = vld [vmem:[%s1 + $0x10] sm:$0xff]
      %v390 = vld [vmem:[%s1 + $0x18] sm:$0xff]
      %v391 = vld [vmem:[%s1 + $0x20] sm:$0xff]
      %v392 = vld [vmem:[%s1 + $0x28] sm:$0xff]
      %v393 = vld [vmem:[%s1 + $0x30] sm:$0xff]
      %v394 = vld [vmem:[%s1 + $0x38] sm:$0xff]
      %v395 = vld [vmem:[%s1 + $0x40] sm:$0xff]
      %v396 = vld [vmem:[%s1 + $0x48] sm:$0xff]
      %v397 = vld [vmem:[%s1 + $0x50] sm:$0xff]
      %v398 = vld [vmem:[%s1 + $0x58] sm:$0xff]
      %v399 = vld [vmem:[%s1 + $0x60] sm:$0xff]
      %v400 = vld [vmem:[%s1 + $0x68] sm:$0xff]
      %v401 = vld [vmem:[%s1 + $0x70] sm:$0xff]
      %v402 = vld [vmem:[%s1 + $0x78] sm:$0xff]
      %v403 = vld [vmem:[%s2] sm:$0xff]
      %v404 = vld [vmem:[%s2 + $0x8] sm:$0xff]
      %v405 = vld [vmem:[%s2 + $0x10] sm:$0xff]
      %v406 = vld [vmem:[%s2 + $0x18] sm:$0xff]
      %v407 = vld [vmem:[%s2 + $0x20] sm:$0xff]
      %v408 = vld [vmem:[%s2 + $0x28] sm:$0xff]
      %v409 = vld [vmem:[%s2 + $0x30] sm:$0xff]
      %v410 = vld [vmem:[%s2 + $0x38] sm:$0xff]
      %v411 = vld [vmem:[%s2 + $0x40] sm:$0xff]
      %v412 = vld [vmem:[%s2 + $0x48] sm:$0xff]
      %v413 = vld [vmem:[%s2 + $0x50] sm:$0xff]
      %v414 = vld [vmem:[%s2 + $0x58] sm:$0xff]
      %v415 = vld [vmem:[%s2 + $0x60] sm:$0xff]
      %v416 = vld [vmem:[%s2 + $0x68] sm:$0xff]
      %v417 = vld [vmem:[%s2 + $0x70] sm:$0xff]
      %v418 = vld [vmem:[%s2 + $0x78] sm:$0xff]
      %v419 = vld [vmem:[%s3] sm:$0xff]
      %v420 = vld [vmem:[%s3 + $0x8] sm:$0xff]
      %v421 = vld [vmem:[%s3 + $0x10] sm:$0xff]
      %v422 = vld [vmem:[%s3 + $0x18] sm:$0xff]
      %v423 = vld [vmem:[%s3 + $0x20] sm:$0xff]
      %v424 = vld [vmem:[%s3 + $0x28] sm:$0xff]
      %v425 = vld [vmem:[%s3 + $0x30] sm:$0xff]
      %v426 = vld [vmem:[%s3 + $0x38] sm:$0xff]
      %v427 = vld [vmem:[%s3 + $0x40] sm:$0xff]
      %v428 = vld [vmem:[%s3 + $0x48] sm:$0xff]
      %v429 = vld [vmem:[%s3 + $0x50] sm:$0xff]
      %v430 = vld [vmem:[%s3 + $0x58] sm:$0xff]
      %v431 = vld [vmem:[%s3 + $0x60] sm:$0xff]
      %v432 = vld [vmem:[%s3 + $0x68] sm:$0xff]
      %v433 = vld [vmem:[%s3 + $0x70] sm:$0xff]
      %v434 = vld [vmem:[%s3 + $0x78] sm:$0xff]
      %v435 = vld [vmem:[%s4] sm:$0xff]
      %v436 = vld [vmem:[%s4 + $0x8] sm:$0xff]
      %v437 = vld [vmem:[%s4 + $0x10] sm:$0xff]
      %v438 = vld [vmem:[%s4 + $0x18] sm:$0xff]
      %v439 = vld [vmem:[%s4 + $0x20] sm:$0xff]
      %v440 = vld [vmem:[%s4 + $0x28] sm:$0xff]
      %v441 = vld [vmem:[%s4 + $0x30] sm:$0xff]
      %v442 = vld [vmem:[%s4 + $0x38] sm:$0xff]
      %v443 = vld [vmem:[%s4 + $0x40] sm:$0xff]
      %v444 = vld [vmem:[%s4 + $0x48] sm:$0xff]
      %v445 = vld [vmem:[%s4 + $0x50] sm:$0xff]
      %v446 = vld [vmem:[%s4 + $0x58] sm:$0xff]
      %v447 = vld [vmem:[%s4 + $0x60] sm:$0xff]
      %v448 = vld [vmem:[%s4 + $0x68] sm:$0xff]
      %v449 = vld [vmem:[%s4 + $0x70] sm:$0xff]
      %v450 = vld [vmem:[%s4 + $0x78] sm:$0xff]
      %v451 = vld [vmem:[%s5] sm:$0xff]
      %v452 = vld [vmem:[%s5 + $0x8] sm:$0xff]
      %v453 = vld [vmem:[%s5 + $0x10] sm:$0xff]
      %v454 = vld [vmem:[%s5 + $0x18] sm:$0xff]
      %v455 = vld [vmem:[%s5 + $0x20] sm:$0xff]
      %v456 = vld [vmem:[%s5 + $0x28] sm:$0xff]
      %v457 = vld [vmem:[%s5 + $0x30] sm:$0xff]
      %v458 = vld [vmem:[%s5 + $0x38] sm:$0xff]
      %v459 = vld [vmem:[%s5 + $0x40] sm:$0xff]
      %v460 = vld [vmem:[%s5 + $0x48] sm:$0xff]
      %v461 = vld [vmem:[%s5 + $0x50] sm:$0xff]
      %v462 = vld [vmem:[%s5 + $0x58] sm:$0xff]
      %v463 = vld [vmem:[%s5 + $0x60] sm:$0xff]
      %v464 = vld [vmem:[%s5 + $0x68] sm:$0xff]
      %v465 = vld [vmem:[%s5 + $0x70] sm:$0xff]
      %v466 = vld [vmem:[%s5 + $0x78] sm:$0xff]
      %467 = vmatprep.subr.mxu0 0.0
      %468 = vmatpush1.msra.mxu0 %v387
      %469 = vmatprep.subr.mxu0 0.0
      %470 = vmatpush1.msra.mxu0 %v388
      %471 = vmatprep.subr.mxu0 0.0
      %472 = vmatpush1.msra.mxu0 %v389
      %473 = vmatprep.subr.mxu0 0.0
      %474 = vmatpush1.msra.mxu0 %v390
      %475 = vmatprep.subr.mxu0 0.0
      %476 = vmatpush1.msra.mxu0 %v391
      %477 = vmatprep.subr.mxu0 0.0
      %478 = vmatpush1.msra.mxu0 %v392
      %479 = vmatprep.subr.mxu0 0.0
      %480 = vmatpush1.msra.mxu0 %v393
      %481 = vmatprep.subr.mxu0 0.0
      %482 = vmatpush1.msra.mxu0 %v394
      %483 = vmatprep.subr.mxu0 0.0
      %484 = vmatpush1.msra.mxu0 %v395
      %485 = vmatprep.subr.mxu0 0.0
      %486 = vmatpush1.msra.mxu0 %v396
      %487 = vmatprep.subr.mxu0 0.0
      %488 = vmatpush1.msra.mxu0 %v397
      %489 = vmatprep.subr.mxu0 0.0
      %490 = vmatpush1.msra.mxu0 %v398
      %491 = vmatprep.subr.mxu0 0.0
      %492 = vmatpush1.msra.mxu0 %v399
      %493 = vmatprep.subr.mxu0 0.0
      %494 = vmatpush1.msra.mxu0 %v400
      %495 = vmatprep.subr.mxu0 0.0
      %496 = vmatpush1.msra.mxu0 %v401
      %497 = vmatprep.subr.mxu0 0.0
      %498 = vmatpush1.msra.mxu0 %v402
      %499 = vmatprep.subr.mxu0 0.0
      %500 = vmatpush1.msra.mxu0 0.0
      %501 = vmatprep.subr.mxu0 0.0
      %502 = vmatpush1.msra.mxu0 0.0
      %503 = vmatprep.subr.mxu0 0.0
      %504 = vmatpush1.msra.mxu0 0.0
      %505 = vmatprep.subr.mxu0 0.0
      %506 = vmatpush1.msra.mxu0 0.0
      %507 = vmatprep.subr.mxu0 0.0
      %508 = vmatpush1.msra.mxu0 0.0
      %509 = vmatprep.subr.mxu0 0.0
      %510 = vmatpush1.msra.mxu0 0.0
      %511 = vmatprep.subr.mxu0 0.0
      %512 = vmatpush1.msra.mxu0 0.0
      %513 = vmatprep.subr.mxu0 0.0
      %514 = vmatpush1.msra.mxu0 0.0
      %515 = vmatprep.subr.mxu0 0.0
      %516 = vmatpush1.msra.mxu0 0.0
      %517 = vmatprep.subr.mxu0 0.0
      %518 = vmatpush1.msra.mxu0 0.0
      %519 = vmatprep.subr.mxu0 0.0
      %520 = vmatpush1.msra.mxu0 0.0
      %521 = vmatprep.subr.mxu0 0.0
      %522 = vmatpush1.msra.mxu0 0.0
      %523 = vmatprep.subr.mxu0 0.0
      %524 = vmatpush1.msra.mxu0 0.0
      %525 = vmatprep.subr.mxu0 0.0
      %526 = vmatpush1.msra.mxu0 0.0
      %527 = vmatprep.subr.mxu0 0.0
      %528 = vmatpush1.msra.mxu0 0.0
      %529 = vmatprep.subr.mxu0 0.0
      %530 = vmatpush1.msra.mxu0 0.0
      %531 = vmatprep.mubr.f32.mxu0 0.0
      %532 = vmatmul.mubr.f32.gmra.mrb[0].mxu0 %v386
      %v533 = vpop.f32.mrb[0].mxu0
      %v534 = vadd.f32 0.0, %v533
      %v535 = vpop.f32.mrb[0].mxu0
      %536 = vdwg.mxu0
      %v537 = vld [vmem:[%s6] sm:$0x1]
      %v538 = vld [vmem:[%s7] sm:$0x1]
      %539 = vmatprep.subr.mxu0 0.0
      %540 = vmatpush1.msra.mxu0 %v435
      %541 = vmatprep.subr.mxu0 0.0
      %542 = vmatpush1.msra.mxu0 %v436
      %543 = vmatprep.subr.mxu0 0.0
      %544 = vmatpush1.msra.mxu0 %v437
      %545 = vmatprep.subr.mxu0 0.0
      %546 = vmatpush1.msra.mxu0 %v438
      %547 = vmatprep.subr.mxu0 0.0
      %548 = vmatpush1.msra.mxu0 %v439
      %549 = vmatprep.subr.mxu0 0.0
      %550 = vmatpush1.msra.mxu0 %v440
      %551 = vmatprep.subr.mxu0 0.0
      %552 = vmatpush1.msra.mxu0 %v441
      %553 = vmatprep.subr.mxu0 0.0
      %554 = vmatpush1.msra.mxu0 %v442
      %555 = vmatprep.subr.mxu0 0.0
      %556 = vmatpush1.msra.mxu0 %v443
      %557 = vmatprep.subr.mxu0 0.0
      %558 = vmatpush1.msra.mxu0 %v444
      %559 = vmatprep.subr.mxu0 0.0
      %560 = vmatpush1.msra.mxu0 %v445
      %561 = vmatprep.subr.mxu0 0.0
      %562 = vmatpush1.msra.mxu0 %v446
      %563 = vmatprep.subr.mxu0 0.0
      %564 = vmatpush1.msra.mxu0 %v447
      %565 = vmatprep.subr.mxu0 0.0
      %566 = vmatpush1.msra.mxu0 %v448
      %567 = vmatprep.subr.mxu0 0.0
      %568 = vmatpush1.msra.mxu0 %v449
      %569 = vmatprep.subr.mxu0 0.0
      %570 = vmatpush1.msra.mxu0 %v450
      %571 = vmatprep.subr.mxu0 0.0
      %572 = vmatpush1.msra.mxu0 0.0
      %573 = vmatprep.subr.mxu0 0.0
      %574 = vmatpush1.msra.mxu0 0.0
      %575 = vmatprep.subr.mxu0 0.0
      %576 = vmatpush1.msra.mxu0 0.0
      %577 = vmatprep.subr.mxu0 0.0
      %578 = vmatpush1.msra.mxu0 0.0
      %579 = vmatprep.subr.mxu0 0.0
      %580 = vmatpush1.msra.mxu0 0.0
      %581 = vmatprep.subr.mxu0 0.0
      %582 = vmatpush1.msra.mxu0 0.0
      %583 = vmatprep.subr.mxu0 0.0
      %584 = vmatpush1.msra.mxu0 0.0
      %585 = vmatprep.subr.mxu0 0.0
      %586 = vmatpush1.msra.mxu0 0.0
      %587 = vmatprep.subr.mxu0 0.0
      %588 = vmatpush1.msra.mxu0 0.0
      %589 = vmatprep.subr.mxu0 0.0
      %590 = vmatpush1.msra.mxu0 0.0
      %591 = vmatprep.subr.mxu0 0.0
      %592 = vmatpush1.msra.mxu0 0.0
      %593 = vmatprep.subr.mxu0 0.0
      %594 = vmatpush1.msra.mxu0 0.0
      %595 = vmatprep.subr.mxu0 0.0
      %596 = vmatpush1.msra.mxu0 0.0
      %597 = vmatprep.subr.mxu0 0.0
      %598 = vmatpush1.msra.mxu0 0.0
      %599 = vmatprep.subr.mxu0 0.0
      %600 = vmatpush1.msra.mxu0 0.0
      %601 = vmatprep.subr.mxu0 0.0
      %602 = vmatpush1.msra.mxu0 0.0
      %603 = vmatprep.mubr.f32.mxu0 0.0
      %604 = vmatmul.mubr.f32.gmra.mrb[0].mxu0 %v534
      %v605 = vpop.f32.mrb[0].mxu0
      %v606 = vadd.f32 0.0, %v605
      %v607 = vpop.f32.mrb[0].mxu0
      %608 = vdwg.mxu0
      %v609 = vsub.f32 %v534, %v606
      %v610 = vmul.f32 %v609, %v609
      %611 = vmatprep.subr.mxu0 0.0
      %612 = vmatpush1.msra.mxu0 %v435
      %613 = vmatprep.subr.mxu0 0.0
      %614 = vmatpush1.msra.mxu0 %v436
      %615 = vmatprep.subr.mxu0 0.0
      %616 = vmatpush1.msra.mxu0 %v437
      %617 = vmatprep.subr.mxu0 0.0
      %618 = vmatpush1.msra.mxu0 %v438
      %619 = vmatprep.subr.mxu0 0.0
      %620 = vmatpush1.msra.mxu0 %v439
      %621 = vmatprep.subr.mxu0 0.0
      %622 = vmatpush1.msra.mxu0 %v440
      %623 = vmatprep.subr.mxu0 0.0
      %624 = vmatpush1.msra.mxu0 %v441
      %625 = vmatprep.subr.mxu0 0.0
      %626 = vmatpush1.msra.mxu0 %v442
      %627 = vmatprep.subr.mxu0 0.0
      %628 = vmatpush1.msra.mxu0 %v443
      %629 = vmatprep.subr.mxu0 0.0
      %630 = vmatpush1.msra.mxu0 %v444
      %631 = vmatprep.subr.mxu0 0.0
      %632 = vmatpush1.msra.mxu0 %v445
      %633 = vmatprep.subr.mxu0 0.0
      %634 = vmatpush1.msra.mxu0 %v446
      %635 = vmatprep.subr.mxu0 0.0
      %636 = vmatpush1.msra.mxu0 %v447
      %637 = vmatprep.subr.mxu0 0.0
      %638 = vmatpush1.msra.mxu0 %v448
      %639 = vmatprep.subr.mxu0 0.0
      %640 = vmatpush1.msra.mxu0 %v449
      %641 = vmatprep.subr.mxu0 0.0
      %642 = vmatpush1.msra.mxu0 %v450
      %643 = vmatprep.subr.mxu0 0.0
      %644 = vmatpush1.msra.mxu0 0.0
      %645 = vmatprep.subr.mxu0 0.0
      %646 = vmatpush1.msra.mxu0 0.0
      %647 = vmatprep.subr.mxu0 0.0
      %648 = vmatpush1.msra.mxu0 0.0
      %649 = vmatprep.subr.mxu0 0.0
      %650 = vmatpush1.msra.mxu0 0.0
      %651 = vmatprep.subr.mxu0 0.0
      %652 = vmatpush1.msra.mxu0 0.0
      %653 = vmatprep.subr.mxu0 0.0
      %654 = vmatpush1.msra.mxu0 0.0
      %655 = vmatprep.subr.mxu0 0.0
      %656 = vmatpush1.msra.mxu0 0.0
      %657 = vmatprep.subr.mxu0 0.0
      %658 = vmatpush1.msra.mxu0 0.0
      %659 = vmatprep.subr.mxu0 0.0
      %660 = vmatpush1.msra.mxu0 0.0
      %661 = vmatprep.subr.mxu0 0.0
      %662 = vmatpush1.msra.mxu0 0.0
      %663 = vmatprep.subr.mxu0 0.0
      %664 = vmatpush1.msra.mxu0 0.0
      %665 = vmatprep.subr.mxu0 0.0
      %666 = vmatpush1.msra.mxu0 0.0
      %667 = vmatprep.subr.mxu0 0.0
      %668 = vmatpush1.msra.mxu0 0.0
      %669 = vmatprep.subr.mxu0 0.0
      %670 = vmatpush1.msra.mxu0 0.0
      %671 = vmatprep.subr.mxu0 0.0
      %672 = vmatpush1.msra.mxu0 0.0
      %673 = vmatprep.subr.mxu0 0.0
      %674 = vmatpush1.msra.mxu0 0.0
      %675 = vmatprep.mubr.f32.mxu0 0.0
      %676 = vmatmul.mubr.f32.gmra.mrb[0].mxu0 %v610
      %v677 = vpop.f32.mrb[0].mxu0
      %v678 = vadd.f32 1e-05, %v677
      %v679 = vpop.f32.mrb[0].mxu0
      %680 = vdwg.mxu0
      %v681 = vrsqrt.pop %v678
      %v682 = vmul.f32 %v609, %v681
      %v684 = vlaneseq
      %v685 = vshrl.u32 %v684, 7
      %v686 = vsub.s32 0, %v685
      %v687 = vrot.slane %v537, %v686
      %v689 = vmul.f32 %v682, %v687
      %v691 = vlaneseq
      %v692 = vshrl.u32 %v691, 7
      %v693 = vsub.s32 0, %v692
      %v694 = vrot.slane %v538, %v693
      %v696 = vadd.f32 %v689, %v694
      %697 = vmatprep.subr.mxu0 0.0
      %698 = vmatpush1.msra.mxu0 %v403
      %699 = vmatprep.subr.mxu0 0.0
      %700 = vmatpush1.msra.mxu0 %v404
      %701 = vmatprep.subr.mxu0 0.0
      %702 = vmatpush1.msra.mxu0 %v405
      %703 = vmatprep.subr.mxu0 0.0
      %704 = vmatpush1.msra.mxu0 %v406
      %705 = vmatprep.subr.mxu0 0.0
      %706 = vmatpush1.msra.mxu0 %v407
      %707 = vmatprep.subr.mxu0 0.0
      %708 = vmatpush1.msra.mxu0 %v408
      %709 = vmatprep.subr.mxu0 0.0
      %710 = vmatpush1.msra.mxu0 %v409
      %711 = vmatprep.subr.mxu0 0.0
      %712 = vmatpush1.msra.mxu0 %v410
      %713 = vmatprep.subr.mxu0 0.0
      %714 = vmatpush1.msra.mxu0 %v411
      %715 = vmatprep.subr.mxu0 0.0
      %716 = vmatpush1.msra.mxu0 %v412
      %717 = vmatprep.subr.mxu0 0.0
      %718 = vmatpush1.msra.mxu0 %v413
      %719 = vmatprep.subr.mxu0 0.0
      %720 = vmatpush1.msra.mxu0 %v414
      %721 = vmatprep.subr.mxu0 0.0
      %722 = vmatpush1.msra.mxu0 %v415
      %723 = vmatprep.subr.mxu0 0.0
      %724 = vmatpush1.msra.mxu0 %v416
      %725 = vmatprep.subr.mxu0 0.0
      %726 = vmatpush1.msra.mxu0 %v417
      %727 = vmatprep.subr.mxu0 0.0
      %728 = vmatpush1.msra.mxu0 %v418
      %729 = vmatprep.subr.mxu0 0.0
      %730 = vmatpush1.msra.mxu0 0.0
      %731 = vmatprep.subr.mxu0 0.0
      %732 = vmatpush1.msra.mxu0 0.0
      %733 = vmatprep.subr.mxu0 0.0
      %734 = vmatpush1.msra.mxu0 0.0
      %735 = vmatprep.subr.mxu0 0.0
      %736 = vmatpush1.msra.mxu0 0.0
      %737 = vmatprep.subr.mxu0 0.0
      %738 = vmatpush1.msra.mxu0 0.0
      %739 = vmatprep.subr.mxu0 0.0
      %740 = vmatpush1.msra.mxu0 0.0
      %741 = vmatprep.subr.mxu0 0.0
      %742 = vmatpush1.msra.mxu0 0.0
      %743 = vmatprep.subr.mxu0 0.0
      %744 = vmatpush1.msra.mxu0 0.0
      %745 = vmatprep.subr.mxu0 0.0
      %746 = vmatpush1.msra.mxu0 0.0
      %747 = vmatprep.subr.mxu0 0.0
      %748 = vmatpush1.msra.mxu0 0.0
      %749 = vmatprep.subr.mxu0 0.0
      %750 = vmatpush1.msra.mxu0 0.0
      %751 = vmatprep.subr.mxu0 0.0
      %752 = vmatpush1.msra.mxu0 0.0
      %753 = vmatprep.subr.mxu0 0.0
      %754 = vmatpush1.msra.mxu0 0.0
      %755 = vmatprep.subr.mxu0 0.0
      %756 = vmatpush1.msra.mxu0 0.0
      %757 = vmatprep.subr.mxu0 0.0
      %758 = vmatpush1.msra.mxu0 0.0
      %759 = vmatprep.subr.mxu0 0.0
      %760 = vmatpush1.msra.mxu0 0.0
      %761 = vmatprep.mubr.f32.mxu0 0.0
      %762 = vmatmul.mubr.f32.gmra.mrb[0].mxu0 %v696
      %v763 = vpop.f32.mrb[0].mxu0
      %v764 = vadd.f32 0.0, %v763
      %v765 = vpop.f32.mrb[0].mxu0
      %766 = vdwg.mxu0
      %767 = vmatprep.subr.mxu0 0.0
      %768 = vmatpush1.msra.mxu0 %v419
      %769 = vmatprep.subr.mxu0 0.0
      %770 = vmatpush1.msra.mxu0 %v420
      %771 = vmatprep.subr.mxu0 0.0
      %772 = vmatpush1.msra.mxu0 %v421
      %773 = vmatprep.subr.mxu0 0.0
      %774 = vmatpush1.msra.mxu0 %v422
      %775 = vmatprep.subr.mxu0 0.0
      %776 = vmatpush1.msra.mxu0 %v423
      %777 = vmatprep.subr.mxu0 0.0
      %778 = vmatpush1.msra.mxu0 %v424
      %779 = vmatprep.subr.mxu0 0.0
      %780 = vmatpush1.msra.mxu0 %v425
      %781 = vmatprep.subr.mxu0 0.0
      %782 = vmatpush1.msra.mxu0 %v426
      %783 = vmatprep.subr.mxu0 0.0
      %784 = vmatpush1.msra.mxu0 %v427
      %785 = vmatprep.subr.mxu0 0.0
      %786 = vmatpush1.msra.mxu0 %v428
      %787 = vmatprep.subr.mxu0 0.0
      %788 = vmatpush1.msra.mxu0 %v429
      %789 = vmatprep.subr.mxu0 0.0
      %790 = vmatpush1.msra.mxu0 %v430
      %791 = vmatprep.subr.mxu0 0.0
      %792 = vmatpush1.msra.mxu0 %v431
      %793 = vmatprep.subr.mxu0 0.0
      %794 = vmatpush1.msra.mxu0 %v432
      %795 = vmatprep.subr.mxu0 0.0
      %796 = vmatpush1.msra.mxu0 %v433
      %797 = vmatprep.subr.mxu0 0.0
      %798 = vmatpush1.msra.mxu0 %v434
      %799 = vmatprep.subr.mxu0 0.0
      %800 = vmatpush1.msra.mxu0 0.0
      %801 = vmatprep.subr.mxu0 0.0
      %802 = vmatpush1.msra.mxu0 0.0
      %803 = vmatprep.subr.mxu0 0.0
      %804 = vmatpush1.msra.mxu0 0.0
      %805 = vmatprep.subr.mxu0 0.0
      %806 = vmatpush1.msra.mxu0 0.0
      %807 = vmatprep.subr.mxu0 0.0
      %808 = vmatpush1.msra.mxu0 0.0
      %809 = vmatprep.subr.mxu0 0.0
      %810 = vmatpush1.msra.mxu0 0.0
      %811 = vmatprep.subr.mxu0 0.0
      %812 = vmatpush1.msra.mxu0 0.0
      %813 = vmatprep.subr.mxu0 0.0
      %814 = vmatpush1.msra.mxu0 0.0
      %815 = vmatprep.subr.mxu0 0.0
      %816 = vmatpush1.msra.mxu0 0.0
      %817 = vmatprep.subr.mxu0 0.0
      %818 = vmatpush1.msra.mxu0 0.0
      %819 = vmatprep.subr.mxu0 0.0
      %820 = vmatpush1.msra.mxu0 0.0
      %821 = vmatprep.subr.mxu0 0.0
      %822 = vmatpush1.msra.mxu0 0.0
      %823 = vmatprep.subr.mxu0 0.0
      %824 = vmatpush1.msra.mxu0 0.0
      %825 = vmatprep.subr.mxu0 0.0
      %826 = vmatpush1.msra.mxu0 0.0
      %827 = vmatprep.subr.mxu0 0.0
      %828 = vmatpush1.msra.mxu0 0.0
      %829 = vmatprep.subr.mxu0 0.0
      %830 = vmatpush1.msra.mxu0 0.0
      %831 = vmatprep.mubr.f32.mxu0 0.0
      %832 = vmatmul.mubr.f32.gmra.mrb[0].mxu0 %v764
      %v833 = vpop.f32.mrb[0].mxu0
      %v834 = vadd.f32 0.0, %v833
      %v835 = vpop.f32.mrb[0].mxu0
      %836 = vdwg.mxu0
      %v837 = vld [vmem:[%s8] sm:$0x1]
      %v838 = vld [vmem:[%s9] sm:$0x1]
      %839 = vmatprep.subr.mxu0 0.0
      %840 = vmatpush1.msra.mxu0 %v435
      %841 = vmatprep.subr.mxu0 0.0
      %842 = vmatpush1.msra.mxu0 %v436
      %843 = vmatprep.subr.mxu0 0.0
      %844 = vmatpush1.msra.mxu0 %v437
      %845 = vmatprep.subr.mxu0 0.0
      %846 = vmatpush1.msra.mxu0 %v438
      %847 = vmatprep.subr.mxu0 0.0
      %848 = vmatpush1.msra.mxu0 %v439
      %849 = vmatprep.subr.mxu0 0.0
      %850 = vmatpush1.msra.mxu0 %v440
      %851 = vmatprep.subr.mxu0 0.0
      %852 = vmatpush1.msra.mxu0 %v441
      %853 = vmatprep.subr.mxu0 0.0
      %854 = vmatpush1.msra.mxu0 %v442
      %855 = vmatprep.subr.mxu0 0.0
      %856 = vmatpush1.msra.mxu0 %v443
      %857 = vmatprep.subr.mxu0 0.0
      %858 = vmatpush1.msra.mxu0 %v444
      %859 = vmatprep.subr.mxu0 0.0
      %860 = vmatpush1.msra.mxu0 %v445
      %861 = vmatprep.subr.mxu0 0.0
      %862 = vmatpush1.msra.mxu0 %v446
      %863 = vmatprep.subr.mxu0 0.0
      %864 = vmatpush1.msra.mxu0 %v447
      %865 = vmatprep.subr.mxu0 0.0
      %866 = vmatpush1.msra.mxu0 %v448
      %867 = vmatprep.subr.mxu0 0.0
      %868 = vmatpush1.msra.mxu0 %v449
      %869 = vmatprep.subr.mxu0 0.0
      %870 = vmatpush1.msra.mxu0 %v450
      %871 = vmatprep.subr.mxu0 0.0
      %872 = vmatpush1.msra.mxu0 0.0
      %873 = vmatprep.subr.mxu0 0.0
      %874 = vmatpush1.msra.mxu0 0.0
      %875 = vmatprep.subr.mxu0 0.0
      %876 = vmatpush1.msra.mxu0 0.0
      %877 = vmatprep.subr.mxu0 0.0
      %878 = vmatpush1.msra.mxu0 0.0
      %879 = vmatprep.subr.mxu0 0.0
      %880 = vmatpush1.msra.mxu0 0.0
      %881 = vmatprep.subr.mxu0 0.0
      %882 = vmatpush1.msra.mxu0 0.0
      %883 = vmatprep.subr.mxu0 0.0
      %884 = vmatpush1.msra.mxu0 0.0
      %885 = vmatprep.subr.mxu0 0.0
      %886 = vmatpush1.msra.mxu0 0.0
      %887 = vmatprep.subr.mxu0 0.0
      %888 = vmatpush1.msra.mxu0 0.0
      %889 = vmatprep.subr.mxu0 0.0
      %890 = vmatpush1.msra.mxu0 0.0
      %891 = vmatprep.subr.mxu0 0.0
      %892 = vmatpush1.msra.mxu0 0.0
      %893 = vmatprep.subr.mxu0 0.0
      %894 = vmatpush1.msra.mxu0 0.0
      %895 = vmatprep.subr.mxu0 0.0
      %896 = vmatpush1.msra.mxu0 0.0
      %897 = vmatprep.subr.mxu0 0.0
      %898 = vmatpush1.msra.mxu0 0.0
      %899 = vmatprep.subr.mxu0 0.0
      %900 = vmatpush1.msra.mxu0 0.0
      %901 = vmatprep.subr.mxu0 0.0
      %902 = vmatpush1.msra.mxu0 0.0
      %903 = vmatprep.mubr.f32.mxu0 0.0
      %904 = vmatmul.mubr.f32.gmra.mrb[0].mxu0 %v834
      %v905 = vpop.f32.mrb[0].mxu0
      %v906 = vadd.f32 0.0, %v905
      %v907 = vpop.f32.mrb[0].mxu0
      %908 = vdwg.mxu0
      %v909 = vsub.f32 %v834, %v906
      %v910 = vmul.f32 %v909, %v909
      %911 = vmatprep.subr.mxu0 0.0
      %912 = vmatpush1.msra.mxu0 %v435
      %913 = vmatprep.subr.mxu0 0.0
      %914 = vmatpush1.msra.mxu0 %v436
      %915 = vmatprep.subr.mxu0 0.0
      %916 = vmatpush1.msra.mxu0 %v437
      %917 = vmatprep.subr.mxu0 0.0
      %918 = vmatpush1.msra.mxu0 %v438
      %919 = vmatprep.subr.mxu0 0.0
      %920 = vmatpush1.msra.mxu0 %v439
      %921 = vmatprep.subr.mxu0 0.0
      %922 = vmatpush1.msra.mxu0 %v440
      %923 = vmatprep.subr.mxu0 0.0
      %924 = vmatpush1.msra.mxu0 %v441
      %925 = vmatprep.subr.mxu0 0.0
      %926 = vmatpush1.msra.mxu0 %v442
      %927 = vmatprep.subr.mxu0 0.0
      %928 = vmatpush1.msra.mxu0 %v443
      %929 = vmatprep.subr.mxu0 0.0
      %930 = vmatpush1.msra.mxu0 %v444
      %931 = vmatprep.subr.mxu0 0.0
      %932 = vmatpush1.msra.mxu0 %v445
      %933 = vmatprep.subr.mxu0 0.0
      %934 = vmatpush1.msra.mxu0 %v446
      %935 = vmatprep.subr.mxu0 0.0
      %936 = vmatpush1.msra.mxu0 %v447
      %937 = vmatprep.subr.mxu0 0.0
      %938 = vmatpush1.msra.mxu0 %v448
      %939 = vmatprep.subr.mxu0 0.0
      %940 = vmatpush1.msra.mxu0 %v449
      %941 = vmatprep.subr.mxu0 0.0
      %942 = vmatpush1.msra.mxu0 %v450
      %943 = vmatprep.subr.mxu0 0.0
      %944 = vmatpush1.msra.mxu0 0.0
      %945 = vmatprep.subr.mxu0 0.0
      %946 = vmatpush1.msra.mxu0 0.0
      %947 = vmatprep.subr.mxu0 0.0
      %948 = vmatpush1.msra.mxu0 0.0
      %949 = vmatprep.subr.mxu0 0.0
      %950 = vmatpush1.msra.mxu0 0.0
      %951 = vmatprep.subr.mxu0 0.0
      %952 = vmatpush1.msra.mxu0 0.0
      %953 = vmatprep.subr.mxu0 0.0
      %954 = vmatpush1.msra.mxu0 0.0
      %955 = vmatprep.subr.mxu0 0.0
      %956 = vmatpush1.msra.mxu0 0.0
      %957 = vmatprep.subr.mxu0 0.0
      %958 = vmatpush1.msra.mxu0 0.0
      %959 = vmatprep.subr.mxu0 0.0
      %960 = vmatpush1.msra.mxu0 0.0
      %961 = vmatprep.subr.mxu0 0.0
      %962 = vmatpush1.msra.mxu0 0.0
      %963 = vmatprep.subr.mxu0 0.0
      %964 = vmatpush1.msra.mxu0 0.0
      %965 = vmatprep.subr.mxu0 0.0
      %966 = vmatpush1.msra.mxu0 0.0
      %967 = vmatprep.subr.mxu0 0.0
      %968 = vmatpush1.msra.mxu0 0.0
      %969 = vmatprep.subr.mxu0 0.0
      %970 = vmatpush1.msra.mxu0 0.0
      %971 = vmatprep.subr.mxu0 0.0
      %972 = vmatpush1.msra.mxu0 0.0
      %973 = vmatprep.subr.mxu0 0.0
      %974 = vmatpush1.msra.mxu0 0.0
      %975 = vmatprep.mubr.f32.mxu0 0.0
      %976 = vmatmul.mubr.f32.gmra.mrb[0].mxu0 %v910
      %v977 = vpop.f32.mrb[0].mxu0
      %v978 = vadd.f32 1e-05, %v977
      %v979 = vpop.f32.mrb[0].mxu0
      %980 = vdwg.mxu0
      %v981 = vrsqrt.pop %v978
      %v982 = vmul.f32 %v909, %v981
      %v984 = vlaneseq
      %v985 = vshrl.u32 %v984, 7
      %v986 = vsub.s32 0, %v985
      %v987 = vrot.slane %v837, %v986
      %v989 = vmul.f32 %v982, %v987
      %v991 = vlaneseq
      %v992 = vshrl.u32 %v991, 7
      %v993 = vsub.s32 0, %v992
      %v994 = vrot.slane %v838, %v993
      %v996 = vadd.f32 %v989, %v994
      %vm997 = vcmask 1043456
      %v998 = vsel %vm997, %v996, -inf
      %999 = vmax.xlane.f32.xlu0 %v998
      %v1000 = vpop.xlane.xlu0 %999
      %v1001 = vsub.f32 %v996, %v1000
      %v1002 = vmul.f32 %v1001, 1.442695
      %v1003 = vpow.pop %v1002
      %1004 = vmatprep.subr.mxu0 0.0
      %1005 = vmatpush1.msra.mxu0 %v451
      %1006 = vmatprep.subr.mxu0 0.0
      %1007 = vmatpush1.msra.mxu0 %v452
      %1008 = vmatprep.subr.mxu0 0.0
      %1009 = vmatpush1.msra.mxu0 %v453
      %1010 = vmatprep.subr.mxu0 0.0
      %1011 = vmatpush1.msra.mxu0 %v454
      %1012 = vmatprep.subr.mxu0 0.0
      %1013 = vmatpush1.msra.mxu0 %v455
      %1014 = vmatprep.subr.mxu0 0.0
      %1015 = vmatpush1.msra.mxu0 %v456
      %1016 = vmatprep.subr.mxu0 0.0
      %1017 = vmatpush1.msra.mxu0 %v457
      %1018 = vmatprep.subr.mxu0 0.0
      %1019 = vmatpush1.msra.mxu0 %v458
      %1020 = vmatprep.subr.mxu0 0.0
      %1021 = vmatpush1.msra.mxu0 %v459
      %1022 = vmatprep.subr.mxu0 0.0
      %1023 = vmatpush1.msra.mxu0 %v460
      %1024 = vmatprep.subr.mxu0 0.0
      %1025 = vmatpush1.msra.mxu0 %v461
      %1026 = vmatprep.subr.mxu0 0.0
      %1027 = vmatpush1.msra.mxu0 %v462
      %1028 = vmatprep.subr.mxu0 0.0
      %1029 = vmatpush1.msra.mxu0 %v463
      %1030 = vmatprep.subr.mxu0 0.0
      %1031 = vmatpush1.msra.mxu0 %v464
      %1032 = vmatprep.subr.mxu0 0.0
      %1033 = vmatpush1.msra.mxu0 %v465
      %1034 = vmatprep.subr.mxu0 0.0
      %1035 = vmatpush1.msra.mxu0 %v466
      %1036 = vmatprep.subr.mxu0 0.0
      %1037 = vmatpush1.msra.mxu0 0.0
      %1038 = vmatprep.subr.mxu0 0.0
      %1039 = vmatpush1.msra.mxu0 0.0
      %1040 = vmatprep.subr.mxu0 0.0
      %1041 = vmatpush1.msra.mxu0 0.0
      %1042 = vmatprep.subr.mxu0 0.0
      %1043 = vmatpush1.msra.mxu0 0.0
      %1044 = vmatprep.subr.mxu0 0.0
      %1045 = vmatpush1.msra.mxu0 0.0
      %1046 = vmatprep.subr.mxu0 0.0
      %1047 = vmatpush1.msra.mxu0 0.0
      %1048 = vmatprep.subr.mxu0 0.0
      %1049 = vmatpush1.msra.mxu0 0.0
      %1050 = vmatprep.subr.mxu0 0.0
      %1051 = vmatpush1.msra.mxu0 0.0
      %1052 = vmatprep.subr.mxu0 0.0
      %1053 = vmatpush1.msra.mxu0 0.0
      %1054 = vmatprep.subr.mxu0 0.0
      %1055 = vmatpush1.msra.mxu0 0.0
      %1056 = vmatprep.subr.mxu0 0.0
      %1057 = vmatpush1.msra.mxu0 0.0
      %1058 = vmatprep.subr.mxu0 0.0
      %1059 = vmatpush1.msra.mxu0 0.0
      %1060 = vmatprep.subr.mxu0 0.0
      %1061 = vmatpush1.msra.mxu0 0.0
      %1062 = vmatprep.subr.mxu0 0.0
      %1063 = vmatpush1.msra.mxu0 0.0
      %1064 = vmatprep.subr.mxu0 0.0
      %1065 = vmatpush1.msra.mxu0 0.0
      %1066 = vmatprep.subr.mxu0 0.0
      %1067 = vmatpush1.msra.mxu0 0.0
      %1068 = vmatprep.mubr.f32.mxu0 0.0
      %1069 = vmatmul.mubr.f32.gmra.mrb[0].mxu0 %v1003
      %v1070 = vpop.f32.mrb[0].mxu0
      %v1071 = vadd.f32 0.0, %v1070
      %v1072 = vpop.f32.mrb[0].mxu0
      %1073 = vdwg.mxu0
      %v1074 = vlog2.pop %v1071
      %v1075 = vmul.f32 %v1074, 0.6931472
      %v1076 = vsub.f32 %v1001, %v1075
      %1077 = vst [vmem:[%s385] sm:$0xf] %v1076
      %p1078 = scmp.lt.s32.totalorder %s25, 1
      %s1079 = scalar_select %p1078, %s25, 1
      %p1080 = scmp.lt.s32.totalorder %s26, 0
      %s1081 = scalar_select %p1080, %s26, 0
      %s1082 = sadd.s32 %s1081, %s1079
      %s1083 = smul.addr %s1082, 4
      %s1084 = scalar_lea.vmem %s10, %s1083
      // Predicated region
      $region61: #{gcn_forward.1} parent=59 // pred_check
        %p1085 = pneg %p270
      $region62: #{gcn_forward.1} parent=59 // pred_check_branch
        %1087 = sbr.rel (%p1085) target = $region64
      $region63: #{gcn_forward.1} parent=59 // pred_region
        _
      $region64: #{gcn_forward.1} parent=59 // pred_fallthru
        _
    $region60: #{gcn_forward.1} parent=5 // pred_fallthru
      _
    %p1088 = scmp.le.s32.totalorder 2, %s16
    // Predicated region
    $region65: #{gcn_forward.1} parent=5 // pred_check
      %p1089 = pneg %p1088
    $region66: #{gcn_forward.1} parent=5 // pred_check_branch
      %1091 = sbr.rel (%p1089) target = $region68
    $region67: #{gcn_forward.1} parent=5 // pred_region
      %s1092 = ssub.s32 %s16, 2
      // Predicated region
      $region69: #{gcn_forward.1} parent=67 // pred_check
        %p1093 = pneg %p276
      $region70: #{gcn_forward.1} parent=67 // pred_check_branch
        %1095 = sbr.rel (%p1093) target = $region72
      $region71: #{gcn_forward.1} parent=67 // pred_region
        %p1096 = scmp.lt.s32.totalorder %s27, 1
        %s1097 = scalar_select %p1096, %s27, 1
        %p1098 = scmp.lt.s32.totalorder %s28, 0
        %s1099 = scalar_select %p1098, %s28, 0
        %s1100 = sadd.s32 %s1099, %s1097
        %s1101 = smul.addr %s1100, 4
        %s1102 = scalar_lea.vmem %s10, %s1101
      $region72: #{gcn_forward.1} parent=67 // pred_fallthru
        _
    $region68: #{gcn_forward.1} parent=5 // pred_fallthru
      _
  $region6: #{gcn_forward.1} parent=0 // loop_footer
    %s20 = sadd.s32 1, %s16
  $region7: #{gcn_forward.1} parent=0 // loop_footer_branch
    %15 = sbr.rel target = $region3
  $region8: #{gcn_forward.1} parent=0 // loop_exit
    _

</llo_original>
